<compile_context>
chip_gen: v6e
topology: v6e:2x2x1
jax: 0.10.0
libtpu: 0.0.40
codegen_flags: <defaults>
</compile_context>

<pallas_src>
import functools

import jax
import jax.numpy as jnp
from jax import lax
from jax.experimental import pallas as pl
from jax.experimental.pallas import tpu as pltpu


def _round_up(x, m):
    return ((x + m - 1) // m) * m


def _gelu_exact(x):
    # nn.GELU() default (exact / erf formulation), computed in f32.
    return 0.5 * x * (1.0 + lax.erf(x * jnp.float32(0.7071067811865476)))


def swiglu2_kernel(x_ref, w1g_ref, b1g_ref, w2_ref, b2_ref, o_ref, *, hidden_dim):
    x = x_ref[...]  # native dtype -> fast MXU path; accumulate in f32

    # Fused first stage: [tm, D] @ [D, 2H] -> [tm, 2H] = [h | g_pre]
    hg = jnp.dot(x, w1g_ref[...], preferred_element_type=jnp.float32)
    hg = hg + b1g_ref[...].astype(jnp.float32)

    h = hg[:, :hidden_dim]
    g_pre = hg[:, hidden_dim:]

    a = _gelu_exact(h)                       # VPU (erf) — exact GELU
    g = jax.nn.sigmoid(g_pre)                # EUP

    # Second stage: [tm, H] @ [H, D] -> [tm, D]
    y = jnp.dot(a.astype(w2_ref.dtype), w2_ref[...],
                preferred_element_type=jnp.float32)
    y = y + b2_ref[...].astype(jnp.float32)

    o_ref[...] = (y * g).astype(o_ref.dtype)


def swiglu2(x, w1, b1, w2, b2, wg, bg, *, tm=256,
            vmem_limit_bytes=60 * 1024 * 1024):
    """x: [B, D]; w1/wg: [D, H]; w2: [H, D]; biases: [1, H] / [1, D].

    Weights are PyTorch weights transposed to [in_features, out_features].
    """
    B, D = x.shape
    H = w1.shape[1]
    assert w2.shape == (H, D) and wg.shape == (D, H)

    # Fuse the two x-sharing projections: W1|Wg -> [D, 2H], b1|bg -> [1, 2H].
    w1g = jnp.concatenate([w1, wg], axis=1)
    b1g = jnp.concatenate([b1, bg], axis=1)

    # Effective batch tile: no larger than the (sublane-padded) batch.
    tm_eff = min(tm, _round_up(B, 8))
    Bp = _round_up(B, tm_eff)
    x_p = x if Bp == B else jnp.pad(x, ((0, Bp - B), (0, 0)))
    grid = (pl.cdiv(Bp, tm_eff),)

    itemsize = jnp.dtype(x.dtype).itemsize
    flops = 2 * Bp * D * (2 * H) + 2 * Bp * H * D          # both matmul stages
    transcendentals = 2 * Bp * H                            # erf + sigmoid
    bytes_accessed = (
        Bp * D * itemsize                                   # x
        + w1g.size * jnp.dtype(w1g.dtype).itemsize
        + b1g.size * jnp.dtype(b1g.dtype).itemsize
        + w2.size * jnp.dtype(w2.dtype).itemsize
        + b2.size * jnp.dtype(b2.dtype).itemsize
        + Bp * D * itemsize                                 # out
    )

    out = pl.pallas_call(
        functools.partial(swiglu2_kernel, hidden_dim=H),
        out_shape=jax.ShapeDtypeStruct((Bp, D), x.dtype),
        grid_spec=pltpu.PrefetchScalarGridSpec(
            num_scalar_prefetch=0,
            grid=grid,
            in_specs=[
                pl.BlockSpec((tm_eff, D), lambda i: (i, 0)),   # x tile
                pl.BlockSpec((D, 2 * H), lambda i: (0, 0)),    # fused W1|Wg
                pl.BlockSpec((1, 2 * H), lambda i: (0, 0)),    # fused b1|bg
                pl.BlockSpec((H, D), lambda i: (0, 0)),        # W2
                pl.BlockSpec((1, D), lambda i: (0, 0)),        # b2
            ],
            out_specs=pl.BlockSpec((tm_eff, D), lambda i: (i, 0)),
        ),
        compiler_params=pltpu.CompilerParams(
            dimension_semantics=("parallel",),
            vmem_limit_bytes=vmem_limit_bytes,
        ),
        cost_estimate=pl.CostEstimate(
            flops=flops,
            transcendentals=transcendentals,
            bytes_accessed=bytes_accessed,
        ),
    )(x_p, w1g, b1g, w2, b2)

    return out if Bp == B else out[:B]


def swiglu2_ref(x, w1, b1, w2, b2, wg, bg):
    h = x @ w1 + b1
    a = 0.5 * h * (1.0 + lax.erf(h / jnp.sqrt(2.0)))
    y = a @ w2 + b2
    g = jax.nn.sigmoid(x @ wg + bg)
    return y * g


if __name__ == "__main__":
    # Small shapes consistent with the module: batch=16, input_dim=hidden_dim=128.
    B, D, H = 16, 128, 128

    key = jax.random.PRNGKey(0)
    k_x, k_w1, k_b1, k_w2, k_b2, k_wg, k_bg = jax.random.split(key, 7)

    # nn.Linear-style init (weight [out, in]) stored transposed as [in, out].
    bound1 = 1.0 / jnp.sqrt(D)  # linear1 / gate: fan_in = D
    bound2 = 1.0 / jnp.sqrt(H)  # linear2: fan_in = H

    w1 = jax.random.uniform(k_w1, (D, H), jnp.float32, -bound1, bound1)
    b1 = jax.random.uniform(k_b1, (1, H), jnp.float32, -bound1, bound1)
    w2 = jax.random.uniform(k_w2, (H, D), jnp.float32, -bound2, bound2)
    b2 = jax.random.uniform(k_b2, (1, D), jnp.float32, -bound2, bound2)
    wg = jax.random.uniform(k_wg, (D, H), jnp.float32, -bound1, bound1)
    bg = jax.random.uniform(k_bg, (1, H), jnp.float32, -bound1, bound1)

    x = jax.random.normal(k_x, (B, D), jnp.float32)

    out = swiglu2(x, w1, b1, w2, b2, wg, bg)
    out = jax.block_until_ready(out)

    ref = swiglu2_ref(x, w1, b1, w2, b2, wg, bg)
    assert out.shape == (B, D) and out.dtype == x.dtype
    assert jnp.allclose(out, ref, atol=2e-5, rtol=2e-5), float(
        jnp.max(jnp.abs(out - ref))
    )

    print("KERNEL_OK")
</pallas_src>

<mosaic_0001>
module attributes {stable_mosaic.version = 11 : i64} {
  func.func @swiglu2_kernel(%arg0: i32, %arg1: memref<16x128xf32, #tpu.memory_space<vmem>>, %arg2: memref<128x256xf32, #tpu.memory_space<vmem>>, %arg3: memref<1x256xf32, #tpu.memory_space<vmem>>, %arg4: memref<128x128xf32, #tpu.memory_space<vmem>>, %arg5: memref<1x128xf32, #tpu.memory_space<vmem>>, %arg6: memref<16x128xf32, #tpu.memory_space<vmem>>) attributes {dimension_semantics = [#tpu.dimension_semantics<parallel>], iteration_bounds = array<i64: 1>, scalar_prefetch = 0 : i64, scratch_operands = 0 : i64, tpu.core_type = #tpu.core_type<tc>, window_params = [{transform_indices = @transform_0, window_bounds = array<i64: 16, 128>}, {pipeline_mode = #tpu.pipeline_mode<synchronous>, transform_indices = @transform_1, window_bounds = array<i64: 128, 256>}, {pipeline_mode = #tpu.pipeline_mode<synchronous>, transform_indices = @transform_2, window_bounds = array<i64: 1, 256>}, {pipeline_mode = #tpu.pipeline_mode<synchronous>, transform_indices = @transform_3, window_bounds = array<i64: 128, 128>}, {pipeline_mode = #tpu.pipeline_mode<synchronous>, transform_indices = @transform_4, window_bounds = array<i64: 1, 128>}, {transform_indices = @transform_5, window_bounds = array<i64: 16, 128>}]} {
    %c0 = arith.constant 0 : index
    %c0_0 = arith.constant 0 : index
    %0 = vector.load %arg1[%c0, %c0_0] : memref<16x128xf32, #tpu.memory_space<vmem>>, vector<16x128xf32>
    %c0_1 = arith.constant 0 : index
    %c0_2 = arith.constant 0 : index
    %1 = vector.load %arg2[%c0_1, %c0_2] : memref<128x256xf32, #tpu.memory_space<vmem>>, vector<128x256xf32>
    %cst = arith.constant dense<0.000000e+00> : vector<16x256xf32>
    %2 = tpu.matmul %0, %1, %cst {dimension_numbers = #tpu.dot_dimension_numbers<[1], [0], [0], [1], [0, 0, 1, 1], [], []>} : vector<16x128xf32>, vector<128x256xf32>, vector<16x256xf32> -> vector<16x256xf32>
    %c0_3 = arith.constant 0 : index
    %c0_4 = arith.constant 0 : index
    %3 = vector.load %arg3[%c0_3, %c0_4] : memref<1x256xf32, #tpu.memory_space<vmem>>, vector<1x256xf32>
    %4 = vector.broadcast %3 : vector<1x256xf32> to vector<16x256xf32>
    %5 = arith.addf %2, %4 : vector<16x256xf32>
    %6 = vector.extract_strided_slice %5 {offsets = [0, 0], sizes = [16, 128], strides = [1, 1]} : vector<16x256xf32> to vector<16x128xf32>
    %7 = vector.extract_strided_slice %5 {offsets = [0, 128], sizes = [16, 128], strides = [1, 1]} : vector<16x256xf32> to vector<16x128xf32>
    %cst_5 = arith.constant 5.000000e-01 : f32
    %8 = vector.broadcast %cst_5 : f32 to vector<16x128xf32>
    %9 = arith.mulf %8, %6 : vector<16x128xf32>
    %cst_6 = arith.constant 0.707106769 : f32
    %10 = vector.broadcast %cst_6 : f32 to vector<16x128xf32>
    %11 = arith.mulf %6, %10 : vector<16x128xf32>
    %12 = math.erf %11 : vector<16x128xf32>
    %cst_7 = arith.constant 1.000000e+00 : f32
    %13 = vector.broadcast %cst_7 : f32 to vector<16x128xf32>
    %14 = arith.addf %13, %12 : vector<16x128xf32>
    %15 = arith.mulf %9, %14 : vector<16x128xf32>
    %16 = arith.negf %7 : vector<16x128xf32>
    %17 = math.exp %16 : vector<16x128xf32>
    %cst_8 = arith.constant 1.000000e+00 : f32
    %18 = vector.broadcast %cst_8 : f32 to vector<16x128xf32>
    %19 = arith.addf %18, %17 : vector<16x128xf32>
    %20 = arith.divf %18, %19 : vector<16x128xf32>
    %c0_9 = arith.constant 0 : index
    %c0_10 = arith.constant 0 : index
    %21 = vector.load %arg4[%c0_9, %c0_10] : memref<128x128xf32, #tpu.memory_space<vmem>>, vector<128x128xf32>
    %cst_11 = arith.constant dense<0.000000e+00> : vector<16x128xf32>
    %22 = tpu.matmul %15, %21, %cst_11 {dimension_numbers = #tpu.dot_dimension_numbers<[1], [0], [0], [1], [0, 0, 1, 1], [], []>} : vector<16x128xf32>, vector<128x128xf32>, vector<16x128xf32> -> vector<16x128xf32>
    %c0_12 = arith.constant 0 : index
    %c0_13 = arith.constant 0 : index
    %23 = vector.load %arg5[%c0_12, %c0_13] : memref<1x128xf32, #tpu.memory_space<vmem>>, vector<1x128xf32>
    %24 = vector.broadcast %23 : vector<1x128xf32> to vector<16x128xf32>
    %25 = arith.addf %22, %24 : vector<16x128xf32>
    %26 = arith.mulf %25, %20 : vector<16x128xf32>
    %c0_14 = arith.constant 0 : index
    %c0_15 = arith.constant 0 : index
    %27 = vector.load %arg6[%c0_14, %c0_15] : memref<16x128xf32, #tpu.memory_space<vmem>>, vector<16x128xf32>
    tpu.vector_store %arg6[%c0_14, %c0_15], %26 {strides = array<i32>} : memref<16x128xf32, #tpu.memory_space<vmem>>, vector<16x128xf32>,
    return
  }
  func.func @transform_0(%arg0: i32) -> (i32, i32) {
    %c0_i32 = arith.constant 0 : i32
    %c0_i32_0 = arith.constant 0 : i32
    return %arg0, %c0_i32 : i32, i32
  }
  func.func @transform_1(%arg0: i32) -> (i32, i32) {
    %c0_i32 = arith.constant 0 : i32
    %c0_i32_0 = arith.constant 0 : i32
    %c0_i32_1 = arith.constant 0 : i32
    return %c0_i32, %c0_i32_0 : i32, i32
  }
  func.func @transform_2(%arg0: i32) -> (i32, i32) {
    %c0_i32 = arith.constant 0 : i32
    %c0_i32_0 = arith.constant 0 : i32
    %c0_i32_1 = arith.constant 0 : i32
    return %c0_i32, %c0_i32_0 : i32, i32
  }
  func.func @transform_3(%arg0: i32) -> (i32, i32) {
    %c0_i32 = arith.constant 0 : i32
    %c0_i32_0 = arith.constant 0 : i32
    %c0_i32_1 = arith.constant 0 : i32
    return %c0_i32, %c0_i32_0 : i32, i32
  }
  func.func @transform_4(%arg0: i32) -> (i32, i32) {
    %c0_i32 = arith.constant 0 : i32
    %c0_i32_0 = arith.constant 0 : i32
    %c0_i32_1 = arith.constant 0 : i32
    return %c0_i32, %c0_i32_0 : i32, i32
  }
  func.func @transform_5(%arg0: i32) -> (i32, i32) {
    %c0_i32 = arith.constant 0 : i32
    %c0_i32_0 = arith.constant 0 : i32
    return %arg0, %c0_i32 : i32, i32
  }
}

</mosaic_0001>

<llo_original>
// kernel: tpu_custom_call.1
$region0: #{tpu_custom_call.1}
  #allocation0 [shape = 'u32[]', space=smem, size = 0x4, offset = 0x4, fixed_abs, tag = 'smem constant byte address 0x4 - core index']
  #allocation1 [shape = 'u32[144,128]{1,0:T(1,128)}', space=vmem, size = 0x12000, scoped, tag = 'internal scratch']
  %s0 = inlined_call_operand.hbm [shape: f32[16,128], index: 0, kind: input, shape index: {}]
  %s1 = inlined_call_operand.hbm [shape: f32[128,256], index: 1, kind: input, shape index: {}]
  %s2 = inlined_call_operand.vmem [shape: f32[1,256], index: 2, kind: input, shape index: {}]
  %s3 = inlined_call_operand.hbm [shape: f32[128,128], index: 3, kind: input, shape index: {}]
  %s4 = inlined_call_operand.vmem [shape: f32[1,128], index: 4, kind: input, shape index: {}]
  %s5 = inlined_call_operand.hbm [shape: f32[16,128], index: 5, kind: output, shape index: {}]
  %s6 = sld [smem:[#allocation0]]
  $region42: #{tpu_custom_call.1} parent=0
    _
  %s8 = ssub.s32 1, %s6
  %s9 = scalar_select 0, %s8, %s6
  $region1: #{tpu_custom_call.1} parent=0
    #allocation2 [shape = 'u8[8192]{0}', space=vmem, size = 0x2000, scoped, tag = 'input window, operand 0, single buffered']
    #allocation3 [shape = 's32[1]{0}', space=sflag, size = 0x4, scoped, tag = 'scoped memory for tpu_custom_call.1']
    #allocation4 [shape = 's32[1]{0}', space=sflag, size = 0x4, scoped, tag = 'scoped memory for tpu_custom_call.1']
    #allocation5 [shape = 'u8[131072]{0}', space=vmem, size = 0x20000, scoped, tag = 'input window, operand 1, single buffered']
    #allocation6 [shape = 's32[1]{0}', space=sflag, size = 0x4, scoped, tag = 'scoped memory for tpu_custom_call.1']
    #allocation7 [shape = 'u8[65536]{0}', space=vmem, size = 0x10000, scoped, tag = 'input window, operand 3, single buffered']
    #allocation8 [shape = 'u8[8192]{0}', space=vmem, size = 0x2000, scoped, tag = 'output window, operand 0, single buffered']
    %10 = vsyncpa [#allocation3], 0
    %11 = vsyncpa [#allocation6], 0
    %12 = vsyncpa [#allocation4], 0
    // Predicated region
    $region2: #{tpu_custom_call.1} parent=1 // pred_check
      _
    $region3: #{tpu_custom_call.1} parent=1 // pred_check_branch
      %14 = sbr.rel (0) target = $region5
    $region4: #{tpu_custom_call.1} parent=1 // pred_region
      %s16 = ssub.s32 256, 256
      %17 = vsyncadd [#allocation3], %s16
      %s18 = sshll.u32 [#allocation2], 4
      %s19 = int_to_ptr.vmem [resolvable:$true] %s18
      %24 = dma.hbm_to_vmem [thread:$0]  %s0, 256, %s19, [#allocation3], 128, 128, 8
    $region5: #{tpu_custom_call.1} parent=1 // pred_fallthru
      _
    // Predicated region
    $region6: #{tpu_custom_call.1} parent=1 // pred_check
      _
    $region7: #{tpu_custom_call.1} parent=1 // pred_check_branch
      %26 = sbr.rel (0) target = $region9
    $region8: #{tpu_custom_call.1} parent=1 // pred_region
      %s28 = ssub.s32 4096, 4096
      %29 = vsyncadd [#allocation6], %s28
      %s30 = sshll.u32 [#allocation5], 4
      %s31 = int_to_ptr.vmem [resolvable:$true] %s30
      %36 = dma.hbm_to_vmem [thread:$0]  %s1, 4096, %s31, [#allocation6], 256, 256, 16
    $region9: #{tpu_custom_call.1} parent=1 // pred_fallthru
      _
    // Predicated region
    $region10: #{tpu_custom_call.1} parent=1 // pred_check
      _
    $region11: #{tpu_custom_call.1} parent=1 // pred_check_branch
      %38 = sbr.rel (0) target = $region13
    $region12: #{tpu_custom_call.1} parent=1 // pred_region
      _
    $region13: #{tpu_custom_call.1} parent=1 // pred_fallthru
      _
    // Predicated region
    $region14: #{tpu_custom_call.1} parent=1 // pred_check
      _
    $region15: #{tpu_custom_call.1} parent=1 // pred_check_branch
      %40 = sbr.rel (0) target = $region17
    $region16: #{tpu_custom_call.1} parent=1 // pred_region
      %s42 = ssub.s32 2048, 2048
      %43 = vsyncadd [#allocation6], %s42
      %s44 = sshll.u32 [#allocation7], 4
      %s45 = int_to_ptr.vmem [resolvable:$true] %s44
      %50 = dma.hbm_to_vmem [thread:$0]  %s3, 2048, %s45, [#allocation6], 128, 128, 8
    $region17: #{tpu_custom_call.1} parent=1 // pred_fallthru
      _
    // Predicated region
    $region18: #{tpu_custom_call.1} parent=1 // pred_check
      _
    $region19: #{tpu_custom_call.1} parent=1 // pred_check_branch
      %52 = sbr.rel (0) target = $region21
    $region20: #{tpu_custom_call.1} parent=1 // pred_region
      _
    $region21: #{tpu_custom_call.1} parent=1 // pred_fallthru
      _
    // Predicated region
    $region22: #{tpu_custom_call.1} parent=1 // pred_check
      _
    $region23: #{tpu_custom_call.1} parent=1 // pred_check_branch
      %54 = sbr.rel (0) target = $region25
    $region24: #{tpu_custom_call.1} parent=1 // pred_region
      %55 = dma.done [#allocation3], 256
    $region25: #{tpu_custom_call.1} parent=1 // pred_fallthru
      _
    // Predicated region
    $region26: #{tpu_custom_call.1} parent=1 // pred_check
      _
    $region27: #{tpu_custom_call.1} parent=1 // pred_check_branch
      %57 = sbr.rel (0) target = $region29
    $region28: #{tpu_custom_call.1} parent=1 // pred_region
      %58 = dma.done [#allocation6], 4096
    $region29: #{tpu_custom_call.1} parent=1 // pred_fallthru
      _
    // Predicated region
    $region30: #{tpu_custom_call.1} parent=1 // pred_check
      _
    $region31: #{tpu_custom_call.1} parent=1 // pred_check_branch
      %60 = sbr.rel (0) target = $region33
    $region32: #{tpu_custom_call.1} parent=1 // pred_region
      %61 = dma.done [#allocation6], 2048
    $region33: #{tpu_custom_call.1} parent=1 // pred_fallthru
      _
    %v62 = vld [vmem:[#allocation2] sm:$0xff]
    %v63 = vld [vmem:[#allocation2 + $0x8] sm:$0xff]
    %v64 = vld [vmem:[#allocation5] sm:$0xff]
    %v65 = vld [vmem:[#allocation5 + $0x8] sm:$0xff]
    %v66 = vld [vmem:[#allocation5 + $0x10] sm:$0xff]
    %v67 = vld [vmem:[#allocation5 + $0x18] sm:$0xff]
    %v68 = vld [vmem:[#allocation5 + $0x20] sm:$0xff]
    %v69 = vld [vmem:[#allocation5 + $0x28] sm:$0xff]
    %v70 = vld [vmem:[#allocation5 + $0x30] sm:$0xff]
    %v71 = vld [vmem:[#allocation5 + $0x38] sm:$0xff]
    %v72 = vld [vmem:[#allocation5 + $0x40] sm:$0xff]
    %v73 = vld [vmem:[#allocation5 + $0x48] sm:$0xff]
    %v74 = vld [vmem:[#allocation5 + $0x50] sm:$0xff]
    %v75 = vld [vmem:[#allocation5 + $0x58] sm:$0xff]
    %v76 = vld [vmem:[#allocation5 + $0x60] sm:$0xff]
    %v77 = vld [vmem:[#allocation5 + $0x68] sm:$0xff]
    %v78 = vld [vmem:[#allocation5 + $0x70] sm:$0xff]
    %v79 = vld [vmem:[#allocation5 + $0x78] sm:$0xff]
    %v80 = vld [vmem:[#allocation5 + $0x80] sm:$0xff]
    %v81 = vld [vmem:[#allocation5 + $0x88] sm:$0xff]
    %v82 = vld [vmem:[#allocation5 + $0x90] sm:$0xff]
    %v83 = vld [vmem:[#allocation5 + $0x98] sm:$0xff]
    %v84 = vld [vmem:[#allocation5 + $0xa0] sm:$0xff]
    %v85 = vld [vmem:[#allocation5 + $0xa8] sm:$0xff]
    %v86 = vld [vmem:[#allocation5 + $0xb0] sm:$0xff]
    %v87 = vld [vmem:[#allocation5 + $0xb8] sm:$0xff]
    %v88 = vld [vmem:[#allocation5 + $0xc0] sm:$0xff]
    %v89 = vld [vmem:[#allocation5 + $0xc8] sm:$0xff]
    %v90 = vld [vmem:[#allocation5 + $0xd0] sm:$0xff]
    %v91 = vld [vmem:[#allocation5 + $0xd8] sm:$0xff]
    %v92 = vld [vmem:[#allocation5 + $0xe0] sm:$0xff]
    %v93 = vld [vmem:[#allocation5 + $0xe8] sm:$0xff]
    %v94 = vld [vmem:[#allocation5 + $0xf0] sm:$0xff]
    %v95 = vld [vmem:[#allocation5 + $0xf8] sm:$0xff]
    %v96 = vld [vmem:[%s2] sm:$0x3]
    %v98 = vlaneseq
    %v99 = vshrl.u32 %v98, 7
    %v100 = vsub.s32 0, %v99
    %v101 = vrot.slane %v96, %v100
    %v102 = vlaneseq
    %v103 = vshrl.u32 %v102, 7
    %v104 = vsub.s32 1, %v103
    %v105 = vrot.slane %v96, %v104
    %108 = vmatprep.subr.mxu0 %v95
    %109 = vmatpush1.msra.mxu0 %v94
    %110 = vmatprep.subr.mxu0 %v93
    %111 = vmatpush1.msra.mxu0 %v92
    %112 = vmatprep.subr.mxu0 %v91
    %113 = vmatpush1.msra.mxu0 %v90
    %114 = vmatprep.subr.mxu0 %v89
    %115 = vmatpush1.msra.mxu0 %v88
    %116 = vmatprep.subr.mxu0 %v87
    %117 = vmatpush1.msra.mxu0 %v86
    %118 = vmatprep.subr.mxu0 %v85
    %119 = vmatpush1.msra.mxu0 %v84
    %120 = vmatprep.subr.mxu0 %v83
    %121 = vmatpush1.msra.mxu0 %v82
    %122 = vmatprep.subr.mxu0 %v81
    %123 = vmatpush1.msra.mxu0 %v80
    %124 = vmatprep.subr.mxu0 %v79
    %125 = vmatpush1.msra.mxu0 %v78
    %126 = vmatprep.subr.mxu0 %v77
    %127 = vmatpush1.msra.mxu0 %v76
    %128 = vmatprep.subr.mxu0 %v75
    %129 = vmatpush1.msra.mxu0 %v74
    %130 = vmatprep.subr.mxu0 %v73
    %131 = vmatpush1.msra.mxu0 %v72
    %132 = vmatprep.subr.mxu0 %v71
    %133 = vmatpush1.msra.mxu0 %v70
    %134 = vmatprep.subr.mxu0 %v69
    %135 = vmatpush1.msra.mxu0 %v68
    %136 = vmatprep.subr.mxu0 %v67
    %137 = vmatpush1.msra.mxu0 %v66
    %138 = vmatprep.subr.mxu0 %v65
    %139 = vmatpush1.msra.mxu0 %v64
    %140 = vmatprep.subr.mxu0 0.0
    %141 = vmatpush2.msra.mxu0 0.0
    %142 = vmatprep.subr.mxu0 0.0
    %143 = vmatpush2.msra.mxu0 0.0
    %144 = vmatprep.subr.mxu0 0.0
    %145 = vmatpush2.msra.mxu0 0.0
    %146 = vmatprep.subr.mxu0 0.0
    %147 = vmatpush2.msra.mxu0 0.0
    %148 = vmatprep.subr.mxu0 0.0
    %149 = vmatpush2.msra.mxu0 0.0
    %150 = vmatprep.subr.mxu0 0.0
    %151 = vmatpush2.msra.mxu0 0.0
    %152 = vmatprep.subr.mxu0 0.0
    %153 = vmatpush2.msra.mxu0 0.0
    %154 = vmatprep.subr.mxu0 0.0
    %155 = vmatpush2.msra.mxu0 0.0
    %156 = vmatprep.subr.mxu0 0.0
    %157 = vmatpush2.msra.mxu0 0.0
    %158 = vmatprep.subr.mxu0 0.0
    %159 = vmatpush2.msra.mxu0 0.0
    %160 = vmatprep.subr.mxu0 0.0
    %161 = vmatpush2.msra.mxu0 0.0
    %162 = vmatprep.subr.mxu0 0.0
    %163 = vmatpush2.msra.mxu0 0.0
    %164 = vmatprep.subr.mxu0 0.0
    %165 = vmatpush2.msra.mxu0 0.0
    %166 = vmatprep.subr.mxu0 0.0
    %167 = vmatpush2.msra.mxu0 0.0
    %168 = vmatprep.subr.mxu0 0.0
    %169 = vmatpush2.msra.mxu0 0.0
    %170 = vmatprep.subr.mxu0 0.0
    %171 = vmatpush2.msra.mxu0 0.0
    %172 = vmatprep.mubr.f32.mxu0 0.0
    %173 = vmatmul.mubr.f32.gmra.mxu0 %v62
    %v174 = vpop.f32.mrf.mxu0
    %v175 = vadd.f32 %v101, %v174
    %v176 = vpop.f32.mrf.mxu0
    %v177 = vadd.f32 %v105, %v176
    %178 = vmatprep.mubr.f32.mxu0 0.0
    %179 = vmatmul.mubr.f32.gmra.mxu0 %v63
    %v180 = vpop.f32.mrf.mxu0
    %v181 = vadd.f32 %v101, %v180
    %v182 = vpop.f32.mrf.mxu0
    %v183 = vadd.f32 %v105, %v182
    %184 = vdwg.mxu0
    %v185 = vmul.f32 %v175, 0.5
    %v186 = vmul.f32 %v181, 0.5
    %v187 = vmul.f32 %v175, 0.70710677
    %v188 = vmul.f32 %v181, 0.70710677
    %v189 = verf.f32.pop %v187
    %v190 = verf.f32.pop %v188
    %v191 = vadd.f32 %v189, 1.0
    %v192 = vadd.f32 %v190, 1.0
    %v193 = vmul.f32 %v185, %v191
    %v194 = vmul.f32 %v186, %v192
    %v195 = vxor.u32 %v177, 2147483648
    %v196 = vxor.u32 %v183, 2147483648
    %v197 = vmul.f32 %v195, 1.442695
    %v198 = vpow.pop %v197
    %v199 = vmul.f32 %v196, 1.442695
    %v200 = vpow.pop %v199
    %v201 = vadd.f32 %v198, 1.0
    %v202 = vadd.f32 %v200, 1.0
    %v203 = vrcp.pop %v201
    %v204 = vmul.f32 1.0, %v203
    %v205 = vrcp.pop %v202
    %v206 = vmul.f32 1.0, %v205
    %v207 = vld [vmem:[#allocation7] sm:$0xff]
    %v208 = vld [vmem:[#allocation7 + $0x8] sm:$0xff]
    %v209 = vld [vmem:[#allocation7 + $0x10] sm:$0xff]
    %v210 = vld [vmem:[#allocation7 + $0x18] sm:$0xff]
    %v211 = vld [vmem:[#allocation7 + $0x20] sm:$0xff]
    %v212 = vld [vmem:[#allocation7 + $0x28] sm:$0xff]
    %v213 = vld [vmem:[#allocation7 + $0x30] sm:$0xff]
    %v214 = vld [vmem:[#allocation7 + $0x38] sm:$0xff]
    %v215 = vld [vmem:[#allocation7 + $0x40] sm:$0xff]
    %v216 = vld [vmem:[#allocation7 + $0x48] sm:$0xff]
    %v217 = vld [vmem:[#allocation7 + $0x50] sm:$0xff]
    %v218 = vld [vmem:[#allocation7 + $0x58] sm:$0xff]
    %v219 = vld [vmem:[#allocation7 + $0x60] sm:$0xff]
    %v220 = vld [vmem:[#allocation7 + $0x68] sm:$0xff]
    %v221 = vld [vmem:[#allocation7 + $0x70] sm:$0xff]
    %v222 = vld [vmem:[#allocation7 + $0x78] sm:$0xff]
    %v223 = vld [vmem:[%s4] sm:$0x1]
    %v225 = vlaneseq
    %v226 = vshrl.u32 %v225, 7
    %v227 = vsub.s32 0, %v226
    %v228 = vrot.slane %v223, %v227
    %230 = vmatprep.subr.mxu0 0.0
    %231 = vmatpush1.msra.mxu0 %v222
    %232 = vmatprep.subr.mxu0 0.0
    %233 = vmatpush1.msra.mxu0 %v221
    %234 = vmatprep.subr.mxu0 0.0
    %235 = vmatpush1.msra.mxu0 %v220
    %236 = vmatprep.subr.mxu0 0.0
    %237 = vmatpush1.msra.mxu0 %v219
    %238 = vmatprep.subr.mxu0 0.0
    %239 = vmatpush1.msra.mxu0 %v218
    %240 = vmatprep.subr.mxu0 0.0
    %241 = vmatpush1.msra.mxu0 %v217
    %242 = vmatprep.subr.mxu0 0.0
    %243 = vmatpush1.msra.mxu0 %v216
    %244 = vmatprep.subr.mxu0 0.0
    %245 = vmatpush1.msra.mxu0 %v215
    %246 = vmatprep.subr.mxu0 0.0
    %247 = vmatpush1.msra.mxu0 %v214
    %248 = vmatprep.subr.mxu0 0.0
    %249 = vmatpush1.msra.mxu0 %v213
    %250 = vmatprep.subr.mxu0 0.0
    %251 = vmatpush1.msra.mxu0 %v212
    %252 = vmatprep.subr.mxu0 0.0
    %253 = vmatpush1.msra.mxu0 %v211
    %254 = vmatprep.subr.mxu0 0.0
    %255 = vmatpush1.msra.mxu0 %v210
    %256 = vmatprep.subr.mxu0 0.0
    %257 = vmatpush1.msra.mxu0 %v209
    %258 = vmatprep.subr.mxu0 0.0
    %259 = vmatpush1.msra.mxu0 %v208
    %260 = vmatprep.subr.mxu0 0.0
    %261 = vmatpush1.msra.mxu0 %v207
    %262 = vmatprep.subr.mxu0 0.0
    %263 = vmatpush2.msra.mxu0 0.0
    %264 = vmatprep.subr.mxu0 0.0
    %265 = vmatpush2.msra.mxu0 0.0
    %266 = vmatprep.subr.mxu0 0.0
    %267 = vmatpush2.msra.mxu0 0.0
    %268 = vmatprep.subr.mxu0 0.0
    %269 = vmatpush2.msra.mxu0 0.0
    %270 = vmatprep.subr.mxu0 0.0
    %271 = vmatpush2.msra.mxu0 0.0
    %272 = vmatprep.subr.mxu0 0.0
    %273 = vmatpush2.msra.mxu0 0.0
    %274 = vmatprep.subr.mxu0 0.0
    %275 = vmatpush2.msra.mxu0 0.0
    %276 = vmatprep.subr.mxu0 0.0
    %277 = vmatpush2.msra.mxu0 0.0
    %278 = vmatprep.subr.mxu0 0.0
    %279 = vmatpush2.msra.mxu0 0.0
    %280 = vmatprep.subr.mxu0 0.0
    %281 = vmatpush2.msra.mxu0 0.0
    %282 = vmatprep.subr.mxu0 0.0
    %283 = vmatpush2.msra.mxu0 0.0
    %284 = vmatprep.subr.mxu0 0.0
    %285 = vmatpush2.msra.mxu0 0.0
    %286 = vmatprep.subr.mxu0 0.0
    %287 = vmatpush2.msra.mxu0 0.0
    %288 = vmatprep.subr.mxu0 0.0
    %289 = vmatpush2.msra.mxu0 0.0
    %290 = vmatprep.subr.mxu0 0.0
    %291 = vmatpush2.msra.mxu0 0.0
    %292 = vmatprep.subr.mxu0 0.0
    %293 = vmatpush2.msra.mxu0 0.0
    %294 = vmatprep.mubr.f32.mxu0 0.0
    %295 = vmatmul.mubr.f32.gmra.mxu0 %v193
    %v296 = vpop.f32.mrf.mxu0
    %v297 = vadd.f32 %v228, %v296
    %v298 = vpop.f32.mrf.mxu0
    %299 = vmatprep.mubr.f32.mxu0 0.0
    %300 = vmatmul.mubr.f32.gmra.mxu0 %v194
    %v301 = vpop.f32.mrf.mxu0
    %v302 = vadd.f32 %v228, %v301
    %v303 = vpop.f32.mrf.mxu0
    %304 = vdwg.mxu0
    %v305 = vmul.f32 %v297, %v204
    %v306 = vmul.f32 %v302, %v206
    %307 = vst [vmem:[#allocation8] sm:$0xff] %v305
    %308 = vst [vmem:[#allocation8 + $0x8] sm:$0xff] %v306
    // Predicated region
    $region34: #{tpu_custom_call.1} parent=1 // pred_check
      _
    $region35: #{tpu_custom_call.1} parent=1 // pred_check_branch
      %310 = sbr.rel (0) target = $region37
    $region36: #{tpu_custom_call.1} parent=1 // pred_region
      %s312 = ssub.s32 256, 256
      %313 = vsyncadd [#allocation4], %s312
      %s314 = sshll.u32 [#allocation8], 4
      %s315 = int_to_ptr.vmem [resolvable:$true] %s314
      %320 = dma.vmem_to_hbm [thread:$0]  %s315, 256, %s5, [#allocation4], 128, 128, 8
    $region37: #{tpu_custom_call.1} parent=1 // pred_fallthru
      _
    // Predicated region
    $region38: #{tpu_custom_call.1} parent=1 // pred_check
      _
    $region39: #{tpu_custom_call.1} parent=1 // pred_check_branch
      %322 = sbr.rel (0) target = $region41
    $region40: #{tpu_custom_call.1} parent=1 // pred_region
      %323 = dma.done [#allocation4], 256
    $region41: #{tpu_custom_call.1} parent=1 // pred_fallthru
      _
    %324 = vsyncpa [#allocation3], 1
    %325 = vsyncpa [#allocation6], 1
    %326 = vsyncpa [#allocation4], 1

</llo_original>
